<compile_context>
chip_gen: v5e
topology: v5e:2x2
jax: 0.10.0
libtpu: 0.0.40
codegen_flags: <defaults>
</compile_context>

<pallas_src>
from functools import partial

import jax
import jax.numpy as jnp
from jax.experimental import pallas as pl
from jax.experimental.pallas import tpu as pltpu


def _cdiv(a, b):
    return -(-a // b)


def _round_up(n, m):
    return ((n + m - 1) // m) * m


# ----------------------------------------------------------------------------- kernel
def _lstm_fc_kernel(x_ref, h0_ref, c0_ref, wih_ref, whh_ref, b_ref, wfc_ref, bfc_ref,
                    logp_ref, hout_ref, cout_ref, h_scr, c_scr):
    t = pl.program_id(1)
    hidden = h_scr.shape[-1]

    # First time step of this batch block: load the carried state into VMEM scratch.
    @pl.when(t == 0)
    def _():
        h_scr[...] = h0_ref[...]
        c_scr[...] = c0_ref[...]

    # gates = x_t @ W_ih^T + h_{t-1} @ W_hh^T + (b_ih + b_hh): two MXU dots, f32 accumulate.
    gates = (
        jnp.dot(x_ref[...], wih_ref[...], preferred_element_type=jnp.float32)
        + jnp.dot(h_scr[...].astype(whh_ref.dtype), whh_ref[...],
                  preferred_element_type=jnp.float32)
        + b_ref[...]
    )

    # PyTorch gate order i, f, g, o (tight packing: slice width == hidden, no per-gate pad).
    i_g = jax.nn.sigmoid(gates[:, 0 * hidden:1 * hidden])
    f_g = jax.nn.sigmoid(gates[:, 1 * hidden:2 * hidden])
    g_g = jnp.tanh(gates[:, 2 * hidden:3 * hidden])
    o_g = jax.nn.sigmoid(gates[:, 3 * hidden:4 * hidden])

    c_new = f_g * c_scr[...] + i_g * g_g
    h_new = o_g * jnp.tanh(c_new)
    c_scr[...] = c_new
    h_scr[...] = h_new

    # Flatten (one step -> identity), ReLU, FC, stable log_softmax.
    # Padded fc-bias lanes are -1e30 so they vanish under exp().
    z = jnp.maximum(h_new, 0.0).astype(wfc_ref.dtype)
    logits = jnp.dot(z, wfc_ref[...], preferred_element_type=jnp.float32) + bfc_ref[...]
    m = jnp.max(logits, axis=-1, keepdims=True)
    shifted = logits - m
    lse = jnp.log(jnp.sum(jnp.exp(shifted), axis=-1, keepdims=True))
    logp_ref[...] = shifted - lse

    # Last step: write the carried state back to HBM.
    @pl.when(t == pl.num_programs(1) - 1)
    def _():
        hout_ref[...] = h_new
        cout_ref[...] = c_new


# ----------------------------------------------------------------------------- wrapper
@partial(jax.jit, static_argnames=("out_dim",))
def streaming_sight_bi_forward(x, hPt, cPt, packed, *, out_dim):
    """x: (B, T, input_dim); hPt, cPt: (1, B, hidden).

    T == 1 reproduces the PyTorch module forward exactly: returns
    (log_probs (B, out_dim), (h, c)).  T > 1 runs T streaming steps inside ONE kernel
    (weights DMA'd once) and returns per-step log-probs of shape (B, T, out_dim)."""
    B, T, input_dim = x.shape
    hidden = hPt.shape[-1]

    w_ih, w_hh, b_g = packed["w_ih"], packed["w_hh"], packed["b"]
    w_fc, b_fc = packed["w_fc"], packed["b_fc"]
    G_pad = w_ih.shape[-1]
    OUT_pad = b_fc.shape[-1]

    # ---- batch tiling: pick grid_b first, then block_b (multiple of 8) -------------
    if B < 16:
        grid_b, block_b = 1, B                 # single full-extent block (legal for any B)
    else:
        grid_b = max(2, _cdiv(B, 512))          # >= 2 blocks so v7x megacore splits the batch
        block_b = _round_up(_cdiv(B, grid_b), 8)
    B_pad = grid_b * block_b

    x_tbd = jnp.transpose(x, (1, 0, 2)).astype(jnp.bfloat16)            # (T, B, in)
    x_tbd = jnp.pad(x_tbd, ((0, 0), (0, B_pad - B), (0, 0)))
    h0 = jnp.pad(hPt[0].astype(jnp.float32), ((0, B_pad - B), (0, 0)))  # (B_pad, hidden)
    c0 = jnp.pad(cPt[0].astype(jnp.float32), ((0, B_pad - B), (0, 0)))

    # ---- VMEM budget & cost estimate (computed, not hard-coded) ---------------------
    w_bytes = w_ih.size * 2 + w_hh.size * 2 + b_g.size * 4 + w_fc.size * 2 + b_fc.size * 4
    stream_bytes = block_b * (input_dim * 2 + OUT_pad * 4)     # x in + logp out (per step)
    state_bytes = block_b * hidden * 4 * 4                     # h0, c0 in + h, c out
    scratch_bytes = block_b * hidden * 4 * 2
    vmem_est = 2 * (w_bytes + stream_bytes + state_bytes) + scratch_bytes
    vmem_limit = int(min(max(2 * vmem_est, 32 * 1024 * 1024), 64 * 1024 * 1024))

    cost = pl.CostEstimate(
        flops=2 * B_pad * T * ((input_dim + hidden) * G_pad + hidden * OUT_pad),
        transcendentals=B_pad * T * (5 * hidden + OUT_pad),
        bytes_accessed=int(w_bytes + B_pad * T * (input_dim * 2 + OUT_pad * 4)
                           + 4 * B_pad * hidden * 4),
    )

    logp, h_new, c_new = pl.pallas_call(
        _lstm_fc_kernel,
        out_shape=(
            jax.ShapeDtypeStruct((T, B_pad, OUT_pad), jnp.float32),
            jax.ShapeDtypeStruct((B_pad, hidden), jnp.float32),
            jax.ShapeDtypeStruct((B_pad, hidden), jnp.float32),
        ),
        grid_spec=pltpu.PrefetchScalarGridSpec(
            num_scalar_prefetch=0,
            grid=(grid_b, T),
            in_specs=[
                pl.BlockSpec((None, block_b, input_dim), lambda i, t: (t, i, 0)),  # x_t
                pl.BlockSpec((block_b, hidden), lambda i, t: (i, 0)),              # h0
                pl.BlockSpec((block_b, hidden), lambda i, t: (i, 0)),              # c0
                pl.BlockSpec((input_dim, G_pad), lambda i, t: (0, 0)),             # W_ih^T (resident)
                pl.BlockSpec((hidden, G_pad), lambda i, t: (0, 0)),                # W_hh^T (resident)
                pl.BlockSpec((1, G_pad), lambda i, t: (0, 0)),                     # gate bias
                pl.BlockSpec((hidden, OUT_pad), lambda i, t: (0, 0)),              # fc W^T (resident)
                pl.BlockSpec((1, OUT_pad), lambda i, t: (0, 0)),                   # fc bias
            ],
            out_specs=(
                pl.BlockSpec((None, block_b, OUT_pad), lambda i, t: (t, i, 0)),    # log-probs
                pl.BlockSpec((block_b, hidden), lambda i, t: (i, 0)),              # h_T
                pl.BlockSpec((block_b, hidden), lambda i, t: (i, 0)),              # c_T
            ),
            scratch_shapes=[
                pltpu.VMEM((block_b, hidden), jnp.float32),   # h carry across time steps
                pltpu.VMEM((block_b, hidden), jnp.float32),   # c carry across time steps
            ],
        ),
        compiler_params=pltpu.CompilerParams(
            dimension_semantics=("parallel", "arbitrary"),
            vmem_limit_bytes=vmem_limit,
        ),
        cost_estimate=cost,
    )(x_tbd, h0, c0, w_ih, w_hh, b_g, w_fc, b_fc)

    h_out = h_new[:B, :][None, :, :]
    c_out = c_new[:B, :][None, :, :]
    if T == 1:
        return logp[0, :B, :out_dim], (h_out, c_out)       # module-faithful output
    return jnp.transpose(logp[:, :B, :out_dim], (1, 0, 2)), (h_out, c_out)


# ----------------------------------------------------------------------------- params
def init_params(key, input_dim, hidden, out_dim):
    """Deterministic synthetic params, PyTorch-style uniform(-1/sqrt(H), 1/sqrt(H)).
    Weights stored pre-transposed (PyTorch shapes: (4H,in), (4H,H), (out,H))."""
    ks = jax.random.split(key, 6)
    bound = 1.0 / jnp.sqrt(jnp.float32(hidden))
    u = lambda k, shape: jax.random.uniform(k, shape, jnp.float32, -bound, bound)
    return {
        "w_ih_t": u(ks[0], (input_dim, 4 * hidden)),
        "w_hh_t": u(ks[1], (hidden, 4 * hidden)),
        "b_ih": u(ks[2], (4 * hidden,)),
        "b_hh": u(ks[3], (4 * hidden,)),
        "fc_w_t": u(ks[4], (hidden, out_dim)),
        "fc_b": u(ks[5], (out_dim,)),
    }


def pack_params(params, input_dim, hidden, out_dim):
    """One-time prep: tail-pad the gate dim jointly (4*hidden -> multiple of 128, no per-gate
    padding), pad the FC output dim to a 128 multiple (lane-dense store, -1e30 padded bias),
    cast MXU operands to bf16; biases stay f32."""
    G = 4 * hidden
    G_pad = _round_up(G, 128)
    OUT_pad = _round_up(out_dim, 128)

    w_ih = jnp.pad(params["w_ih_t"], ((0, 0), (0, G_pad - G))).astype(jnp.bfloat16)
    w_hh = jnp.pad(params["w_hh_t"], ((0, 0), (0, G_pad - G))).astype(jnp.bfloat16)
    b = jnp.pad((params["b_ih"] + params["b_hh"]).reshape(1, G),
                ((0, 0), (0, G_pad - G))).astype(jnp.float32)

    w_fc = jnp.pad(params["fc_w_t"],
                   ((0, 0), (0, OUT_pad - out_dim))).astype(jnp.bfloat16)
    b_fc = jnp.full((1, OUT_pad), -1e30, jnp.float32)
    b_fc = b_fc.at[0, :out_dim].set(params["fc_b"].astype(jnp.float32))

    return {"w_ih": w_ih, "w_hh": w_hh, "b": b, "w_fc": w_fc, "b_fc": b_fc}


# ----------------------------------------------------------------------------- reference
def _reference(x_btd, h0, c0, params):
    """Pure-JAX multi-step reference with the same bf16 rounding of MXU operands, f32 elsewhere.
    Returns per-step log-probs (B, T, out), h_T, c_T."""
    bf = jnp.bfloat16
    H = h0.shape[-1]
    w_ih = params["w_ih_t"].astype(bf)
    w_hh = params["w_hh_t"].astype(bf)
    w_fc = params["fc_w_t"].astype(bf)
    b_g = params["b_ih"] + params["b_hh"]
    h, c = h0, c0
    outs = []
    for t in range(x_btd.shape[1]):
        x_t = x_btd[:, t, :].astype(bf)
        gates = (jnp.dot(x_t, w_ih, preferred_element_type=jnp.float32)
                 + jnp.dot(h.astype(bf), w_hh, preferred_element_type=jnp.float32)
                 + b_g)
        i_g = jax.nn.sigmoid(gates[:, 0 * H:1 * H])
        f_g = jax.nn.sigmoid(gates[:, 1 * H:2 * H])
        g_g = jnp.tanh(gates[:, 2 * H:3 * H])
        o_g = jax.nn.sigmoid(gates[:, 3 * H:4 * H])
        c = f_g * c + i_g * g_g
        h = o_g * jnp.tanh(c)
        z = jnp.maximum(h, 0.0).astype(bf)
        logits = jnp.dot(z, w_fc, preferred_element_type=jnp.float32) + params["fc_b"]
        outs.append(jax.nn.log_softmax(logits, axis=-1))
    return jnp.stack(outs, axis=1), h, c


# ----------------------------------------------------------------------------- demo
if __name__ == "__main__":
    B, T = 2, 1
    input_dim, hidden, out_dim = 16, 32, 10

    key = jax.random.PRNGKey(0)
    k_x, k_h, k_c, k_p, k_x2 = jax.random.split(key, 5)

    x = jax.random.normal(k_x, (B, T, input_dim), jnp.float32)
    hPt = jax.random.normal(k_h, (1, B, hidden), jnp.float32)
    cPt = jax.random.normal(k_c, (1, B, hidden), jnp.float32)
    params = init_params(k_p, input_dim, hidden, out_dim)
    packed = pack_params(params, input_dim, hidden, out_dim)

    # --- module-faithful single step (seq_len == 1, exactly the PyTorch forward) ------
    logp, (h_new, c_new) = streaming_sight_bi_forward(x, hPt, cPt, packed, out_dim=out_dim)
    jax.block_until_ready((logp, h_new, c_new))

    logp_exp, h_exp, c_exp = _reference(x, hPt[0], cPt[0], params)
    assert logp.shape == (B, out_dim)
    assert h_new.shape == (1, B, hidden) and c_new.shape == (1, B, hidden)
    assert jnp.allclose(jnp.sum(jnp.exp(logp), axis=-1), 1.0, atol=1e-5)
    assert jnp.allclose(logp, logp_exp[:, 0, :], atol=1e-2, rtol=1e-2)
    assert jnp.allclose(h_new[0], h_exp, atol=1e-2, rtol=1e-2)
    assert jnp.allclose(c_new[0], c_exp, atol=1e-2, rtol=1e-2)

    # --- amortized streaming path: several steps in ONE kernel call (weights DMA'd once) ---
    T2 = 4
    x_seq = jax.random.normal(k_x2, (B, T2, input_dim), jnp.float32)
    logp_seq, (h_s, c_s) = streaming_sight_bi_forward(x_seq, hPt, cPt, packed, out_dim=out_dim)
    jax.block_until_ready((logp_seq, h_s, c_s))

    logp_seq_exp, h_seq_exp, c_seq_exp = _reference(x_seq, hPt[0], cPt[0], params)
    assert logp_seq.shape == (B, T2, out_dim)
    assert jnp.allclose(logp_seq, logp_seq_exp, atol=2e-2, rtol=2e-2)
    assert jnp.allclose(h_s[0], h_seq_exp, atol=2e-2, rtol=2e-2)
    assert jnp.allclose(c_s[0], c_seq_exp, atol=2e-2, rtol=2e-2)

    print("KERNEL_OK")
</pallas_src>

<mosaic_0001>
module attributes {stable_mosaic.version = 11 : i64} {
  func.func @_lstm_fc_kernel(%arg0: i32, %arg1: i32, %arg2: memref<1x2x16xbf16, #tpu.memory_space<vmem>>, %arg3: memref<2x32xf32, #tpu.memory_space<vmem>>, %arg4: memref<2x32xf32, #tpu.memory_space<vmem>>, %arg5: memref<16x128xbf16, #tpu.memory_space<vmem>>, %arg6: memref<32x128xbf16, #tpu.memory_space<vmem>>, %arg7: memref<1x128xf32, #tpu.memory_space<vmem>>, %arg8: memref<32x128xbf16, #tpu.memory_space<vmem>>, %arg9: memref<1x128xf32, #tpu.memory_space<vmem>>, %arg10: memref<1x2x128xf32, #tpu.memory_space<vmem>>, %arg11: memref<2x32xf32, #tpu.memory_space<vmem>>, %arg12: memref<2x32xf32, #tpu.memory_space<vmem>>, %arg13: memref<2x32xf32, #tpu.memory_space<vmem>>, %arg14: memref<2x32xf32, #tpu.memory_space<vmem>>) attributes {dimension_semantics = [#tpu.dimension_semantics<parallel>, #tpu.dimension_semantics<arbitrary>], iteration_bounds = array<i64: 1, 1>, scalar_prefetch = 0 : i64, scratch_operands = 2 : i64, tpu.core_type = #tpu.core_type<tc>, window_params = [{transform_indices = @transform_0, window_bounds = array<i64: 1, 2, 16>}, {transform_indices = @transform_1, window_bounds = array<i64: 2, 32>}, {transform_indices = @transform_2, window_bounds = array<i64: 2, 32>}, {pipeline_mode = #tpu.pipeline_mode<synchronous>, transform_indices = @transform_3, window_bounds = array<i64: 16, 128>}, {pipeline_mode = #tpu.pipeline_mode<synchronous>, transform_indices = @transform_4, window_bounds = array<i64: 32, 128>}, {pipeline_mode = #tpu.pipeline_mode<synchronous>, transform_indices = @transform_5, window_bounds = array<i64: 1, 128>}, {pipeline_mode = #tpu.pipeline_mode<synchronous>, transform_indices = @transform_6, window_bounds = array<i64: 32, 128>}, {pipeline_mode = #tpu.pipeline_mode<synchronous>, transform_indices = @transform_7, window_bounds = array<i64: 1, 128>}, {transform_indices = @transform_8, window_bounds = array<i64: 1, 2, 128>}, {transform_indices = @transform_9, window_bounds = array<i64: 2, 32>}, {transform_indices = @transform_10, window_bounds = array<i64: 2, 32>}]} {
    %c0_i32 = arith.constant 0 : i32
    %0 = arith.cmpi eq, %arg1, %c0_i32 : i32
    %1 = arith.extui %0 : i1 to i32
    %c0_i32_0 = arith.constant 0 : i32
    %2 = arith.cmpi ne, %1, %c0_i32_0 : i32
    scf.if %2 {
      %c0_34 = arith.constant 0 : index
      %c0_35 = arith.constant 0 : index
      %67 = vector.load %arg3[%c0_34, %c0_35] : memref<2x32xf32, #tpu.memory_space<vmem>>, vector<2x32xf32>
      %c0_36 = arith.constant 0 : index
      %c0_37 = arith.constant 0 : index
      %68 = vector.load %arg13[%c0_36, %c0_37] : memref<2x32xf32, #tpu.memory_space<vmem>>, vector<2x32xf32>
      tpu.vector_store %arg13[%c0_36, %c0_37], %67 {strides = array<i32>} : memref<2x32xf32, #tpu.memory_space<vmem>>, vector<2x32xf32>,
      %c0_38 = arith.constant 0 : index
      %c0_39 = arith.constant 0 : index
      %69 = vector.load %arg4[%c0_38, %c0_39] : memref<2x32xf32, #tpu.memory_space<vmem>>, vector<2x32xf32>
      %c0_40 = arith.constant 0 : index
      %c0_41 = arith.constant 0 : index
      %70 = vector.load %arg14[%c0_40, %c0_41] : memref<2x32xf32, #tpu.memory_space<vmem>>, vector<2x32xf32>
      tpu.vector_store %arg14[%c0_40, %c0_41], %69 {strides = array<i32>} : memref<2x32xf32, #tpu.memory_space<vmem>>, vector<2x32xf32>,
    } else {
    }
    %c0 = arith.constant 0 : index
    %c0_1 = arith.constant 0 : index
    %c0_2 = arith.constant 0 : index
    %3 = vector.load %arg2[%c0, %c0_1, %c0_2] : memref<1x2x16xbf16, #tpu.memory_space<vmem>>, vector<1x2x16xbf16>
    %4 = vector.shape_cast %3 : vector<1x2x16xbf16> to vector<2x16xbf16>
    %c0_3 = arith.constant 0 : index
    %c0_4 = arith.constant 0 : index
    %5 = vector.load %arg5[%c0_3, %c0_4] : memref<16x128xbf16, #tpu.memory_space<vmem>>, vector<16x128xbf16>
    %cst = arith.constant dense<0.000000e+00> : vector<2x128xf32>
    %6 = tpu.matmul %4, %5, %cst {dimension_numbers = #tpu.dot_dimension_numbers<[1], [0], [0], [1], [0, 0, 1, 1], [], []>} : vector<2x16xbf16>, vector<16x128xbf16>, vector<2x128xf32> -> vector<2x128xf32>
    %c0_5 = arith.constant 0 : index
    %c0_6 = arith.constant 0 : index
    %7 = vector.load %arg13[%c0_5, %c0_6] : memref<2x32xf32, #tpu.memory_space<vmem>>, vector<2x32xf32>
    %8 = arith.truncf %7 : vector<2x32xf32> to vector<2x32xbf16>
    %c0_7 = arith.constant 0 : index
    %c0_8 = arith.constant 0 : index
    %9 = vector.load %arg6[%c0_7, %c0_8] : memref<32x128xbf16, #tpu.memory_space<vmem>>, vector<32x128xbf16>
    %cst_9 = arith.constant dense<0.000000e+00> : vector<2x128xf32>
    %10 = tpu.matmul %8, %9, %cst_9 {dimension_numbers = #tpu.dot_dimension_numbers<[1], [0], [0], [1], [0, 0, 1, 1], [], []>} : vector<2x32xbf16>, vector<32x128xbf16>, vector<2x128xf32> -> vector<2x128xf32>
    %11 = arith.addf %6, %10 : vector<2x128xf32>
    %c0_10 = arith.constant 0 : index
    %c0_11 = arith.constant 0 : index
    %12 = vector.load %arg7[%c0_10, %c0_11] : memref<1x128xf32, #tpu.memory_space<vmem>>, vector<1x128xf32>
    %13 = vector.broadcast %12 : vector<1x128xf32> to vector<2x128xf32>
    %14 = arith.addf %11, %13 : vector<2x128xf32>
    %15 = vector.extract_strided_slice %14 {offsets = [0, 0], sizes = [2, 32], strides = [1, 1]} : vector<2x128xf32> to vector<2x32xf32>
    %16 = arith.negf %15 : vector<2x32xf32>
    %17 = math.exp %16 : vector<2x32xf32>
    %cst_12 = arith.constant 1.000000e+00 : f32
    %18 = vector.broadcast %cst_12 : f32 to vector<2x32xf32>
    %19 = arith.addf %18, %17 : vector<2x32xf32>
    %20 = arith.divf %18, %19 : vector<2x32xf32>
    %21 = vector.extract_strided_slice %14 {offsets = [0, 32], sizes = [2, 32], strides = [1, 1]} : vector<2x128xf32> to vector<2x32xf32>
    %22 = arith.negf %21 : vector<2x32xf32>
    %23 = math.exp %22 : vector<2x32xf32>
    %cst_13 = arith.constant 1.000000e+00 : f32
    %24 = vector.broadcast %cst_13 : f32 to vector<2x32xf32>
    %25 = arith.addf %24, %23 : vector<2x32xf32>
    %26 = arith.divf %24, %25 : vector<2x32xf32>
    %27 = vector.extract_strided_slice %14 {offsets = [0, 64], sizes = [2, 32], strides = [1, 1]} : vector<2x128xf32> to vector<2x32xf32>
    %28 = math.tanh %27 : vector<2x32xf32>
    %29 = vector.extract_strided_slice %14 {offsets = [0, 96], sizes = [2, 32], strides = [1, 1]} : vector<2x128xf32> to vector<2x32xf32>
    %30 = arith.negf %29 : vector<2x32xf32>
    %31 = math.exp %30 : vector<2x32xf32>
    %cst_14 = arith.constant 1.000000e+00 : f32
    %32 = vector.broadcast %cst_14 : f32 to vector<2x32xf32>
    %33 = arith.addf %32, %31 : vector<2x32xf32>
    %34 = arith.divf %32, %33 : vector<2x32xf32>
    %c0_15 = arith.constant 0 : index
    %c0_16 = arith.constant 0 : index
    %35 = vector.load %arg14[%c0_15, %c0_16] : memref<2x32xf32, #tpu.memory_space<vmem>>, vector<2x32xf32>
    %36 = arith.mulf %26, %35 : vector<2x32xf32>
    %37 = arith.mulf %20, %28 : vector<2x32xf32>
    %38 = arith.addf %36, %37 : vector<2x32xf32>
    %39 = math.tanh %38 : vector<2x32xf32>
    %40 = arith.mulf %34, %39 : vector<2x32xf32>
    %c0_17 = arith.constant 0 : index
    %c0_18 = arith.constant 0 : index
    %41 = vector.load %arg14[%c0_17, %c0_18] : memref<2x32xf32, #tpu.memory_space<vmem>>, vector<2x32xf32>
    tpu.vector_store %arg14[%c0_17, %c0_18], %38 {strides = array<i32>} : memref<2x32xf32, #tpu.memory_space<vmem>>, vector<2x32xf32>,
    %c0_19 = arith.constant 0 : index
    %c0_20 = arith.constant 0 : index
    %42 = vector.load %arg13[%c0_19, %c0_20] : memref<2x32xf32, #tpu.memory_space<vmem>>, vector<2x32xf32>
    tpu.vector_store %arg13[%c0_19, %c0_20], %40 {strides = array<i32>} : memref<2x32xf32, #tpu.memory_space<vmem>>, vector<2x32xf32>,
    %cst_21 = arith.constant 0.000000e+00 : f32
    %43 = vector.broadcast %cst_21 : f32 to vector<2x32xf32>
    %44 = arith.maximumf %40, %43 : vector<2x32xf32>
    %45 = arith.truncf %44 : vector<2x32xf32> to vector<2x32xbf16>
    %c0_22 = arith.constant 0 : index
    %c0_23 = arith.constant 0 : index
    %46 = vector.load %arg8[%c0_22, %c0_23] : memref<32x128xbf16, #tpu.memory_space<vmem>>, vector<32x128xbf16>
    %cst_24 = arith.constant dense<0.000000e+00> : vector<2x128xf32>
    %47 = tpu.matmul %45, %46, %cst_24 {dimension_numbers = #tpu.dot_dimension_numbers<[1], [0], [0], [1], [0, 0, 1, 1], [], []>} : vector<2x32xbf16>, vector<32x128xbf16>, vector<2x128xf32> -> vector<2x128xf32>
    %c0_25 = arith.constant 0 : index
    %c0_26 = arith.constant 0 : index
    %48 = vector.load %arg9[%c0_25, %c0_26] : memref<1x128xf32, #tpu.memory_space<vmem>>, vector<1x128xf32>
    %49 = vector.broadcast %48 : vector<1x128xf32> to vector<2x128xf32>
    %50 = arith.addf %47, %49 : vector<2x128xf32>
    %cst_27 = arith.constant dense<0xFF800000> : vector<2xf32>
    %51 = vector.multi_reduction <maximumf>, %50, %cst_27 [1] : vector<2x128xf32> to vector<2xf32>
    %52 = vector.shape_cast %51 : vector<2xf32> to vector<2x1xf32>
    %53 = vector.broadcast %52 : vector<2x1xf32> to vector<2x128xf32>
    %54 = arith.subf %50, %53 : vector<2x128xf32>
    %55 = math.exp %54 : vector<2x128xf32>
    %cst_28 = arith.constant dense<0.000000e+00> : vector<2xf32>
    %56 = vector.multi_reduction <add>, %55, %cst_28 [1] : vector<2x128xf32> to vector<2xf32>
    %57 = vector.shape_cast %56 : vector<2xf32> to vector<2x1xf32>
    %58 = math.log %57 : vector<2x1xf32>
    %59 = vector.broadcast %58 : vector<2x1xf32> to vector<2x128xf32>
    %60 = arith.subf %54, %59 : vector<2x128xf32>
    %c0_29 = arith.constant 0 : index
    %c0_30 = arith.constant 0 : index
    %c0_31 = arith.constant 0 : index
    %61 = vector.load %arg10[%c0_29, %c0_30, %c0_31] : memref<1x2x128xf32, #tpu.memory_space<vmem>>, vector<1x2x128xf32>
    %62 = vector.shape_cast %61 : vector<1x2x128xf32> to vector<2x128xf32>
    %63 = vector.shape_cast %60 : vector<2x128xf32> to vector<1x2x128xf32>
    tpu.vector_store %arg10[%c0_29, %c0_30, %c0_31], %63 {strides = array<i32>} : memref<1x2x128xf32, #tpu.memory_space<vmem>>, vector<1x2x128xf32>,
    %c0_i32_32 = arith.constant 0 : i32
    %64 = arith.cmpi eq, %arg1, %c0_i32_32 : i32
    %65 = arith.extui %64 : i1 to i32
    %c0_i32_33 = arith.constant 0 : i32
    %66 = arith.cmpi ne, %65, %c0_i32_33 : i32
    scf.if %66 {
      %c0_34 = arith.constant 0 : index
      %c0_35 = arith.constant 0 : index
      %67 = vector.load %arg11[%c0_34, %c0_35] : memref<2x32xf32, #tpu.memory_space<vmem>>, vector<2x32xf32>
      tpu.vector_store %arg11[%c0_34, %c0_35], %40 {strides = array<i32>} : memref<2x32xf32, #tpu.memory_space<vmem>>, vector<2x32xf32>,
      %c0_36 = arith.constant 0 : index
      %c0_37 = arith.constant 0 : index
      %68 = vector.load %arg12[%c0_36, %c0_37] : memref<2x32xf32, #tpu.memory_space<vmem>>, vector<2x32xf32>
      tpu.vector_store %arg12[%c0_36, %c0_37], %38 {strides = array<i32>} : memref<2x32xf32, #tpu.memory_space<vmem>>, vector<2x32xf32>,
    } else {
    }
    return
  }
  func.func @transform_0(%arg0: i32, %arg1: i32) -> (i32, i32, i32) {
    %c0_i32 = arith.constant 0 : i32
    %c0_i32_0 = arith.constant 0 : i32
    return %arg1, %arg0, %c0_i32 : i32, i32, i32
  }
  func.func @transform_1(%arg0: i32, %arg1: i32) -> (i32, i32) {
    %c0_i32 = arith.constant 0 : i32
    %c0_i32_0 = arith.constant 0 : i32
    return %arg0, %c0_i32 : i32, i32
  }
  func.func @transform_2(%arg0: i32, %arg1: i32) -> (i32, i32) {
    %c0_i32 = arith.constant 0 : i32
    %c0_i32_0 = arith.constant 0 : i32
    return %arg0, %c0_i32 : i32, i32
  }
  func.func @transform_3(%arg0: i32, %arg1: i32) -> (i32, i32) {
    %c0_i32 = arith.constant 0 : i32
    %c0_i32_0 = arith.constant 0 : i32
    %c0_i32_1 = arith.constant 0 : i32
    return %c0_i32, %c0_i32_0 : i32, i32
  }
  func.func @transform_4(%arg0: i32, %arg1: i32) -> (i32, i32) {
    %c0_i32 = arith.constant 0 : i32
    %c0_i32_0 = arith.constant 0 : i32
    %c0_i32_1 = arith.constant 0 : i32
    return %c0_i32, %c0_i32_0 : i32, i32
  }
  func.func @transform_5(%arg0: i32, %arg1: i32) -> (i32, i32) {
    %c0_i32 = arith.constant 0 : i32
    %c0_i32_0 = arith.constant 0 : i32
    %c0_i32_1 = arith.constant 0 : i32
    return %c0_i32, %c0_i32_0 : i32, i32
  }
  func.func @transform_6(%arg0: i32, %arg1: i32) -> (i32, i32) {
    %c0_i32 = arith.constant 0 : i32
    %c0_i32_0 = arith.constant 0 : i32
    %c0_i32_1 = arith.constant 0 : i32
    return %c0_i32, %c0_i32_0 : i32, i32
  }
  func.func @transform_7(%arg0: i32, %arg1: i32) -> (i32, i32) {
    %c0_i32 = arith.constant 0 : i32
    %c0_i32_0 = arith.constant 0 : i32
    %c0_i32_1 = arith.constant 0 : i32
    return %c0_i32, %c0_i32_0 : i32, i32
  }
  func.func @transform_8(%arg0: i32, %arg1: i32) -> (i32, i32, i32) {
    %c0_i32 = arith.constant 0 : i32
    %c0_i32_0 = arith.constant 0 : i32
    return %arg1, %arg0, %c0_i32 : i32, i32, i32
  }
  func.func @transform_9(%arg0: i32, %arg1: i32) -> (i32, i32) {
    %c0_i32 = arith.constant 0 : i32
    %c0_i32_0 = arith.constant 0 : i32
    return %arg0, %c0_i32 : i32, i32
  }
  func.func @transform_10(%arg0: i32, %arg1: i32) -> (i32, i32) {
    %c0_i32 = arith.constant 0 : i32
    %c0_i32_0 = arith.constant 0 : i32
    return %arg0, %c0_i32 : i32, i32
  }
}

</mosaic_0001>

<llo_original>
// kernel: streaming_sight_bi_forward.1
$region0: #{streaming_sight_bi_forward.1}
  #allocation0 [shape = 'u32[]', space=smem, size = 0x4, offset = 0x4, fixed_abs, tag = 'smem constant byte address 0x4 - core index']
  #allocation1 [shape = 'u32[72,128]{1,0:T(1,128)}', space=vmem, size = 0x9000, scoped, tag = 'internal scratch']
  #allocation2 [shape = 'f32[2,32]{1,0:T(2,128)}', space=vmem, size = 0x400, scoped, tag = 'scratch operand']
  #allocation3 [shape = 'f32[2,32]{1,0:T(2,128)}', space=vmem, size = 0x400, scoped, tag = 'scratch operand']
  %s0 = inlined_call_operand.vmem [shape: bf16[1,2,16], index: 0, kind: input, shape index: {}]
  %s1 = inlined_call_operand.vmem [shape: f32[2,32], index: 1, kind: input, shape index: {}]
  %s2 = inlined_call_operand.vmem [shape: f32[2,32], index: 2, kind: input, shape index: {}]
  %s3 = inlined_call_operand.vmem [shape: bf16[16,128], index: 3, kind: input, shape index: {}]
  %s4 = inlined_call_operand.hbm [shape: bf16[32,128], index: 4, kind: input, shape index: {}]
  %s5 = inlined_call_operand.vmem [shape: f32[1,128], index: 5, kind: input, shape index: {}]
  %s6 = inlined_call_operand.hbm [shape: bf16[32,128], index: 6, kind: input, shape index: {}]
  %s7 = inlined_call_operand.vmem [shape: f32[1,128], index: 7, kind: input, shape index: {}]
  %s8 = inlined_call_operand.vmem [shape: f32[1,2,128], index: 8, kind: output, shape index: {0}]
  %s9 = inlined_call_operand.hbm [shape: f32[2,32], index: 9, kind: output, shape index: {1}]
  %s10 = inlined_call_operand.hbm [shape: f32[2,32], index: 10, kind: output, shape index: {2}]
  %11 = xla_tuple %s8, %s9, %s10
  %s12 = sld [smem:[#allocation0]]
  $region74: #{streaming_sight_bi_forward.1} parent=0
    _
  %s14 = ssub.s32 1, %s12
  %s15 = scalar_select 0, %s14, %s12
  $region1: #{streaming_sight_bi_forward.1} parent=0
    #allocation4 [shape = 'u8[8192]{0}', space=vmem, size = 0x2000, scoped, tag = 'input window, operand 4, single buffered']
    #allocation5 [shape = 's32[1]{0}', space=sflag, size = 0x4, scoped, tag = 'scoped memory for streaming_sight_bi_forward.1']
    #allocation6 [shape = 's32[1]{0}', space=sflag, size = 0x4, scoped, tag = 'scoped memory for streaming_sight_bi_forward.1']
    #allocation7 [shape = 'u8[8192]{0}', space=vmem, size = 0x2000, scoped, tag = 'input window, operand 6, single buffered']
    #allocation8 [shape = 's32[1]{0}', space=sflag, size = 0x4, scoped, tag = 'scoped memory for streaming_sight_bi_forward.1']
    #allocation9 [shape = 'u8[1024]{0}', space=vmem, size = 0x400, scoped, tag = 'output window, operand 1, single buffered']
    #allocation10 [shape = 'u8[1024]{0}', space=vmem, size = 0x400, scoped, tag = 'output window, operand 2, single buffered']
    #allocation11 [shape = 's32[1]{0}', space=sflag, size = 0x4, scoped, tag = 'scoped memory for streaming_sight_bi_forward.1']
    %16 = vsyncpa [#allocation5], 0
    %17 = vsyncpa [#allocation8], 0
    %18 = vsyncpa [#allocation6], 0
    %19 = vsyncpa [#allocation11], 0
    // Predicated region
    $region2: #{streaming_sight_bi_forward.1} parent=1 // pred_check
      _
    $region3: #{streaming_sight_bi_forward.1} parent=1 // pred_check_branch
      %21 = sbr.rel (0) target = $region5
    $region4: #{streaming_sight_bi_forward.1} parent=1 // pred_region
      _
    $region5: #{streaming_sight_bi_forward.1} parent=1 // pred_fallthru
      _
    // Predicated region
    $region6: #{streaming_sight_bi_forward.1} parent=1 // pred_check
      _
    $region7: #{streaming_sight_bi_forward.1} parent=1 // pred_check_branch
      %23 = sbr.rel (0) target = $region9
    $region8: #{streaming_sight_bi_forward.1} parent=1 // pred_region
      _
    $region9: #{streaming_sight_bi_forward.1} parent=1 // pred_fallthru
      _
    // Predicated region
    $region10: #{streaming_sight_bi_forward.1} parent=1 // pred_check
      _
    $region11: #{streaming_sight_bi_forward.1} parent=1 // pred_check_branch
      %25 = sbr.rel (0) target = $region13
    $region12: #{streaming_sight_bi_forward.1} parent=1 // pred_region
      _
    $region13: #{streaming_sight_bi_forward.1} parent=1 // pred_fallthru
      _
    // Predicated region
    $region14: #{streaming_sight_bi_forward.1} parent=1 // pred_check
      _
    $region15: #{streaming_sight_bi_forward.1} parent=1 // pred_check_branch
      %27 = sbr.rel (0) target = $region17
    $region16: #{streaming_sight_bi_forward.1} parent=1 // pred_region
      _
    $region17: #{streaming_sight_bi_forward.1} parent=1 // pred_fallthru
      _
    // Predicated region
    $region18: #{streaming_sight_bi_forward.1} parent=1 // pred_check
      _
    $region19: #{streaming_sight_bi_forward.1} parent=1 // pred_check_branch
      %29 = sbr.rel (0) target = $region21
    $region20: #{streaming_sight_bi_forward.1} parent=1 // pred_region
      %31 = vsyncadd [#allocation5], 0
      %s32 = sshll.u32 %s4, 4
      %s33 = int_to_ptr.hbm [resolvable:$true] %s32
      %s34 = sshll.u32 [#allocation4], 4
      %s35 = int_to_ptr.vmem [resolvable:$true] %s34
      %40 = dma.hbm_to_vmem [thread:$0]  %s33, 256, %s35, [#allocation5], 64, 64, 4
    $region21: #{streaming_sight_bi_forward.1} parent=1 // pred_fallthru
      _
    // Predicated region
    $region22: #{streaming_sight_bi_forward.1} parent=1 // pred_check
      _
    $region23: #{streaming_sight_bi_forward.1} parent=1 // pred_check_branch
      %42 = sbr.rel (0) target = $region25
    $region24: #{streaming_sight_bi_forward.1} parent=1 // pred_region
      _
    $region25: #{streaming_sight_bi_forward.1} parent=1 // pred_fallthru
      _
    // Predicated region
    $region26: #{streaming_sight_bi_forward.1} parent=1 // pred_check
      _
    $region27: #{streaming_sight_bi_forward.1} parent=1 // pred_check_branch
      %44 = sbr.rel (0) target = $region29
    $region28: #{streaming_sight_bi_forward.1} parent=1 // pred_region
      %46 = vsyncadd [#allocation8], 0
      %s47 = sshll.u32 %s6, 4
      %s48 = int_to_ptr.hbm [resolvable:$true] %s47
      %s49 = sshll.u32 [#allocation7], 4
      %s50 = int_to_ptr.vmem [resolvable:$true] %s49
      %55 = dma.hbm_to_vmem [thread:$0]  %s48, 256, %s50, [#allocation8], 64, 64, 4
    $region29: #{streaming_sight_bi_forward.1} parent=1 // pred_fallthru
      _
    // Predicated region
    $region30: #{streaming_sight_bi_forward.1} parent=1 // pred_check
      _
    $region31: #{streaming_sight_bi_forward.1} parent=1 // pred_check_branch
      %57 = sbr.rel (0) target = $region33
    $region32: #{streaming_sight_bi_forward.1} parent=1 // pred_region
      _
    $region33: #{streaming_sight_bi_forward.1} parent=1 // pred_fallthru
      _
    // Predicated region
    $region34: #{streaming_sight_bi_forward.1} parent=1 // pred_check
      _
    $region35: #{streaming_sight_bi_forward.1} parent=1 // pred_check_branch
      %59 = sbr.rel (0) target = $region37
    $region36: #{streaming_sight_bi_forward.1} parent=1 // pred_region
      %61 = dma.done [#allocation5], 256
    $region37: #{streaming_sight_bi_forward.1} parent=1 // pred_fallthru
      _
    // Predicated region
    $region38: #{streaming_sight_bi_forward.1} parent=1 // pred_check
      _
    $region39: #{streaming_sight_bi_forward.1} parent=1 // pred_check_branch
      %63 = sbr.rel (0) target = $region41
    $region40: #{streaming_sight_bi_forward.1} parent=1 // pred_region
      %65 = dma.done [#allocation8], 256
    $region41: #{streaming_sight_bi_forward.1} parent=1 // pred_fallthru
      _
    %p67 = scmp.eq.s32.totalorder 0, 0
    // Predicated region
    $region42: #{streaming_sight_bi_forward.1} parent=1 // pred_check
      %p68 = pneg %p67
    $region43: #{streaming_sight_bi_forward.1} parent=1 // pred_check_branch
      %70 = sbr.rel (%p68) target = $region45
    $region44: #{streaming_sight_bi_forward.1} parent=1 // pred_region
      %v71 = vld [vmem:[%s1] sm:$0x3]
      %vm72 = vcmask 254976
      %73 = vst.msk [vmem:[#allocation2] sm:$0x3] %vm72, %v71
      %v74 = vld [vmem:[%s2] sm:$0x3]
      %75 = vst.msk [vmem:[#allocation3] sm:$0x3] %vm72, %v74
    $region45: #{streaming_sight_bi_forward.1} parent=1 // pred_fallthru
      _
    %v76 = vld [vmem:[%s0] sm:$0x1]
    %v77 = vld [vmem:[%s3] sm:$0xf]
    %v78 = vld [vmem:[%s3 + $0x4] sm:$0xf]
    %v79 = vld [vmem:[#allocation2] sm:$0x3]
    %v80 = vpack.c.bf16 %v79, %v79
    %v81 = vld [vmem:[#allocation4] sm:$0xf]
    %v82 = vld [vmem:[#allocation4 + $0x4] sm:$0xf]
    %v83 = vld [vmem:[#allocation4 + $0x8] sm:$0xf]
    %v84 = vld [vmem:[#allocation4 + $0xc] sm:$0xf]
    %v89 = vunpack.c.l.b16 %v81
    %v90 = vunpack.c.l.b16 %v82
    %v91 = vunpack.c.l.b16 %v83
    %v92 = vunpack.c.l.b16 %v84
    %v93 = vpack.c.b16 %v90, %v89
    %v94 = vpack.c.b16 %v92, %v91
    %vm97 = vcmask 261120
    %v99 = vsel %vm97, %v80, 0
    %101 = vmatpush.bf16.msra.mxu0 0
    %102 = vmatpush.bf16.msra.mxu0 0
    %103 = vmatpush.bf16.msra.mxu0 0
    %104 = vmatpush.bf16.msra.mxu0 0
    %105 = vmatpush.bf16.msra.mxu0 0
    %106 = vmatpush.bf16.msra.mxu0 0
    %107 = vmatpush.bf16.msra.mxu0 %v94
    %108 = vmatpush.bf16.msra.mxu0 %v93
    %109 = vmatmul.bf16.gmra.mxu0 %v99
    %v110 = vpop.f32.mrf.mxu0
    %v111 = vadd.f32 0.0, %v110
    %v112 = vpop.f32.mrf.mxu0
    %113 = vdwg.mxu0
    %v116 = vunpack.c.l.b16 %v77
    %v117 = vunpack.c.l.b16 %v78
    %v118 = vpack.c.b16 %v117, %v116
    %vm120 = vcmask 130048
    %v122 = vsel %vm120, %v76, 0
    %124 = vmatpush.bf16.msra.mxu0 0
    %125 = vmatpush.bf16.msra.mxu0 0
    %126 = vmatpush.bf16.msra.mxu0 0
    %127 = vmatpush.bf16.msra.mxu0 0
    %128 = vmatpush.bf16.msra.mxu0 0
    %129 = vmatpush.bf16.msra.mxu0 0
    %130 = vmatpush.bf16.msra.mxu0 0
    %131 = vmatpush.bf16.msra.mxu0 %v118
    %132 = vmatmul.bf16.gmra.mxu0 %v122
    %v133 = vpop.f32.mrf.mxu0
    %v134 = vadd.f32 %v111, %v133
    %v135 = vpop.f32.mrf.mxu0
    %136 = vdwg.mxu0
    %v137 = vld [vmem:[%s5] sm:$0x1]
    %v139 = vperm.slane %v137, 0
    %v141 = vadd.f32 %v134, %v139
    %v142 = vxor.u32 %v141, 2147483648
    %v143 = vmul.f32 %v142, 1.442695
    %v144 = vpow.pop %v143
    %v145 = vadd.f32 %v144, 1.0
    %v146 = vrcp.pop %v145
    %v147 = vmul.f32 %v145, %v146
    %v148 = vsub.f32 1.0, %v147
    %v149 = vmul.f32 %v146, %v148
    %v150 = vadd.f32 %v146, %v149
    %vm151 = vweird.f32 %v145
    %vm152 = vweird.f32 %v146
    %vm153 = vmor %vm151, %vm152
    %v154 = vsel %vm153, %v146, %v150
    %v155 = vand.u32 2147483647, %v145
    %vm156 = vcmp.eq.f32.partialorder %v155, 8.507059e+37
    %v157 = vand.u32 %v145, 2147483648
    %v158 = vor.u32 1.1754944e-38, %v157
    %v159 = vsel %vm156, %v158, %v154
    %v160 = vmul.f32 1.0, %v159
    %v161 = vtanh.pop %v141
    %v162 = vld [vmem:[#allocation3] sm:$0x3]
    %164 = vrot.lane.b32.xlu0 %v162, 32
    %v165 = vpop.permute.xlu0 %164
    %v167 = vmul.f32 %v160, %v165
    %169 = vrot.lane.b32.xlu0 %v161, 64
    %v170 = vpop.permute.xlu0 %169
    %v172 = vmul.f32 %v160, %v170
    %174 = vrot.lane.b32.xlu0 %v172, 32
    %v175 = vpop.permute.xlu0 %174
    %v177 = vadd.f32 %v167, %v175
    %v178 = vtanh.pop %v177
    %180 = vrot.lane.b32.xlu0 %v178, 64
    %v181 = vpop.permute.xlu0 %180
    %v183 = vmul.f32 %v160, %v181
    %185 = vrot.lane.b32.xlu0 %v177, 96
    %v186 = vpop.permute.xlu0 %185
    %vm188 = vcmask 254976
    %189 = vst.msk [vmem:[#allocation3] sm:$0x3] %vm188, %v186
    %191 = vrot.lane.b32.xlu0 %v183, 32
    %v192 = vpop.permute.xlu0 %191
    %194 = vst.msk [vmem:[#allocation2] sm:$0x3] %vm188, %v192
    %v195 = vmax.f32 %v183, 0.0
    %v196 = vpack.c.bf16 %v195, %v195
    %v197 = vld [vmem:[#allocation7] sm:$0xf]
    %v198 = vld [vmem:[#allocation7 + $0x4] sm:$0xf]
    %v199 = vld [vmem:[#allocation7 + $0x8] sm:$0xf]
    %v200 = vld [vmem:[#allocation7 + $0xc] sm:$0xf]
    %v201 = vld [vmem:[%s7] sm:$0x1]
    %v203 = vperm.slane %v201, 0
    %206 = vrot.lane.b32.xlu0 %v196, 32
    %v207 = vpop.permute.xlu0 %206
    %v212 = vunpack.c.l.b16 %v197
    %v213 = vunpack.c.l.b16 %v198
    %v214 = vunpack.c.l.b16 %v199
    %v215 = vunpack.c.l.b16 %v200
    %v216 = vpack.c.b16 %v213, %v212
    %v217 = vpack.c.b16 %v215, %v214
    %v221 = vsel %vm97, %v207, 0
    %223 = vmatpush.bf16.msra.mxu0 0
    %224 = vmatpush.bf16.msra.mxu0 0
    %225 = vmatpush.bf16.msra.mxu0 0
    %226 = vmatpush.bf16.msra.mxu0 0
    %227 = vmatpush.bf16.msra.mxu0 0
    %228 = vmatpush.bf16.msra.mxu0 0
    %229 = vmatpush.bf16.msra.mxu0 %v217
    %230 = vmatpush.bf16.msra.mxu0 %v216
    %231 = vmatmul.bf16.gmra.mxu0 %v221
    %v232 = vpop.f32.mrf.mxu0
    %v233 = vadd.f32 %v203, %v232
    %v234 = vpop.f32.mrf.mxu0
    %235 = vdwg.mxu0
    %vm236 = vcmask 1041408
    %v237 = vsel %vm236, %v233, -inf
    %238 = vmax.xlane.f32.xlu0 %v237
    %v239 = vpop.xlane.xlu0 %238
    %v240 = vsub.f32 %v233, %v239
    %v241 = vmul.f32 %v240, 1.442695
    %v242 = vpow.pop %v241
    %v243 = vsel %vm236, %v242, 0.0
    %244 = vadd.xlane.f32.xlu0 %v243
    %v245 = vpop.xlane.xlu0 %244
    %v246 = vlog2.pop %v245
    %v247 = vmul.f32 %v246, 0.6931472
    %v248 = vsub.f32 %v240, %v247
    %249 = vst [vmem:[%s8] sm:$0x3] %v248
    // Predicated region
    $region46: #{streaming_sight_bi_forward.1} parent=1 // pred_check
      %p250 = pneg %p67
    $region47: #{streaming_sight_bi_forward.1} parent=1 // pred_check_branch
      %252 = sbr.rel (%p250) target = $region49
    $region48: #{streaming_sight_bi_forward.1} parent=1 // pred_region
      %253 = vst.msk [vmem:[#allocation9] sm:$0x3] %vm188, %v192
      %254 = vst.msk [vmem:[#allocation10] sm:$0x3] %vm188, %v186
    $region49: #{streaming_sight_bi_forward.1} parent=1 // pred_fallthru
      _
    // Predicated region
    $region50: #{streaming_sight_bi_forward.1} parent=1 // pred_check
      _
    $region51: #{streaming_sight_bi_forward.1} parent=1 // pred_check_branch
      %256 = sbr.rel (0) target = $region53
    $region52: #{streaming_sight_bi_forward.1} parent=1 // pred_region
      _
    $region53: #{streaming_sight_bi_forward.1} parent=1 // pred_fallthru
      _
    // Predicated region
    $region54: #{streaming_sight_bi_forward.1} parent=1 // pred_check
      _
    $region55: #{streaming_sight_bi_forward.1} parent=1 // pred_check_branch
      %258 = sbr.rel (0) target = $region57
    $region56: #{streaming_sight_bi_forward.1} parent=1 // pred_region
      %260 = vsyncadd [#allocation6], 0
      %s262 = sshll.u32 [#allocation9], 4
      %s263 = int_to_ptr.vmem [resolvable:$true] %s262
      %s264 = sshll.u32 %s9, 4
      %s265 = int_to_ptr.hbm [resolvable:$true] %s264
      %267 = dma.vmem_to_hbm [thread:$0]  %s263, 32, %s265, [#allocation6]
    $region57: #{streaming_sight_bi_forward.1} parent=1 // pred_fallthru
      _
    // Predicated region
    $region58: #{streaming_sight_bi_forward.1} parent=1 // pred_check
      _
    $region59: #{streaming_sight_bi_forward.1} parent=1 // pred_check_branch
      %269 = sbr.rel (0) target = $region61
    $region60: #{streaming_sight_bi_forward.1} parent=1 // pred_region
      %271 = vsyncadd [#allocation11], 0
      %s273 = sshll.u32 [#allocation10], 4
      %s274 = int_to_ptr.vmem [resolvable:$true] %s273
      %s275 = sshll.u32 %s10, 4
      %s276 = int_to_ptr.hbm [resolvable:$true] %s275
      %278 = dma.vmem_to_hbm [thread:$0]  %s274, 32, %s276, [#allocation11]
    $region61: #{streaming_sight_bi_forward.1} parent=1 // pred_fallthru
      _
    // Predicated region
    $region62: #{streaming_sight_bi_forward.1} parent=1 // pred_check
      _
    $region63: #{streaming_sight_bi_forward.1} parent=1 // pred_check_branch
      %280 = sbr.rel (0) target = $region65
    $region64: #{streaming_sight_bi_forward.1} parent=1 // pred_region
      _
    $region65: #{streaming_sight_bi_forward.1} parent=1 // pred_fallthru
      _
    // Predicated region
    $region66: #{streaming_sight_bi_forward.1} parent=1 // pred_check
      _
    $region67: #{streaming_sight_bi_forward.1} parent=1 // pred_check_branch
      %282 = sbr.rel (0) target = $region69
    $region68: #{streaming_sight_bi_forward.1} parent=1 // pred_region
      %284 = dma.done [#allocation6], 32
    $region69: #{streaming_sight_bi_forward.1} parent=1 // pred_fallthru
      _
    // Predicated region
    $region70: #{streaming_sight_bi_forward.1} parent=1 // pred_check
      _
    $region71: #{streaming_sight_bi_forward.1} parent=1 // pred_check_branch
      %286 = sbr.rel (0) target = $region73
    $region72: #{streaming_sight_bi_forward.1} parent=1 // pred_region
      %288 = dma.done [#allocation11], 32
    $region73: #{streaming_sight_bi_forward.1} parent=1 // pred_fallthru
      _
    %289 = vsyncpa [#allocation5], 1
    %290 = vsyncpa [#allocation8], 1
    %291 = vsyncpa [#allocation6], 1
    %292 = vsyncpa [#allocation11], 1

</llo_original>
